<compile_context>
chip_gen: v5e
topology: v5e:2x2
jax: 0.10.0
libtpu: 0.0.40
codegen_flags: <defaults>
</compile_context>

<pallas_src>
import functools

import jax
import jax.numpy as jnp
import numpy as np
from jax import lax
from jax.experimental import pallas as pl
from jax.experimental.pallas import tpu as pltpu

# ----- synthetic "config" (crowd_nav defaults for model_predictive_rl) -------
ROBOT_DIM = 9
HUMAN_DIM = 5
NUM_HUMANS = 5
BATCH = 2

WR_DIMS = [64, 32]          # config.gcn.wr_dims  (last_relu=True)
WH_DIMS = [64, 32]          # config.gcn.wh_dims  (last_relu=True)
X_DIM = 32                  # config.gcn.X_dim
NUM_GCN_LAYERS = 2          # config.gcn.num_layer
LAYERWISE_GRAPH = False     # config.gcn.layerwise_graph
SKIP_CONNECTION = True      # config.gcn.skip_connection
VALUE_DIMS = [32, 100, 100, 1]   # config.model_predictive_rl.value_network_dims

N_NODES = 1 + NUM_HUMANS
LANE = 128                  # padded feature width (TPU lane count)


def _ru8(x):
    return (x + 7) // 8 * 8


# ------------------- packed parameter layout (static) ------------------------
# Every block is zero-padded to 128 lanes; weight matrices to 128 rows, bias rows
# to 8 rows, so every in-kernel slice starts on a sublane-tile boundary.
_PARAM_SPECS = (
    ("wr1", (ROBOT_DIM, WR_DIMS[0]), LANE),
    ("br1", (1, WR_DIMS[0]), 8),
    ("wr2", (WR_DIMS[0], WR_DIMS[1]), LANE),
    ("br2", (1, WR_DIMS[1]), 8),
    ("wh1", (HUMAN_DIM, WH_DIMS[0]), LANE),
    ("bh1", (1, WH_DIMS[0]), 8),
    ("wh2", (WH_DIMS[0], WH_DIMS[1]), LANE),
    ("bh2", (1, WH_DIMS[1]), 8),
    ("wa", (X_DIM, X_DIM), LANE),
    ("gw1", (X_DIM, X_DIM), LANE),
    ("gw2", (X_DIM, X_DIM), LANE),
    ("vw1", (X_DIM, VALUE_DIMS[0]), LANE),
    ("vb1", (1, VALUE_DIMS[0]), 8),
    ("vw2", (VALUE_DIMS[0], VALUE_DIMS[1]), LANE),
    ("vb2", (1, VALUE_DIMS[1]), 8),
    ("vw3", (VALUE_DIMS[1], VALUE_DIMS[2]), LANE),
    ("vb3", (1, VALUE_DIMS[2]), 8),
    ("w4r", (1, VALUE_DIMS[2]), 8),   # last-layer weight stored transposed as a row
    ("b4", (1, VALUE_DIMS[3]), 8),
)

_PARAM_OFFSETS = {}
_row = 0
for _name, _shape, _rows in _PARAM_SPECS:
    _PARAM_OFFSETS[_name] = _row
    _row += _rows
PARAM_ROWS = _row


# ----------------------------- Pallas kernel ---------------------------------
def _value_estimator_kernel(p_ref, s_ref, out_ref, *, batch, num_humans, robot_rows):
    f32 = jnp.float32
    B, H = batch, num_humans
    M = B * (1 + H)                      # total graph nodes across the whole batch

    def weight(name):
        off = _PARAM_OFFSETS[name]
        return p_ref[off:off + LANE, :]          # (128, 128), zero-padded

    def bias(name):
        off = _PARAM_OFFSETS[name]
        return p_ref[off:off + 1, :]             # (1, 128), zero-padded

    def dense(x, wname, bname, relu=True):
        y = jnp.dot(x, weight(wname), preferred_element_type=f32) + bias(bname)
        return jnp.maximum(y, 0.0) if relu else y

    # ---- node embeddings (robot + human MLPs), fully batched --------------------
    robot = s_ref[0:B, :]                               # (B, 128)
    human = s_ref[robot_rows:robot_rows + B * H, :]     # (B*H, 128)

    r_emb = dense(dense(robot, "wr1", "br1"), "wr2", "br2")   # (B, 128)
    h_emb = dense(dense(human, "wh1", "bh1"), "wh2", "bh2")   # (B*H, 128)

    # Flat node-feature matrix: rows [0, B) = robot node of each batch element,
    # rows [B, B + B*H) = human nodes grouped per batch element.
    x = jnp.concatenate([r_emb, h_emb], axis=0)               # (M, 128)

    # ---- per-batch (block-diagonal) connectivity mask ---------------------------
    ri = lax.broadcasted_iota(jnp.int32, (M, M), 0)
    ci = lax.broadcasted_iota(jnp.int32, (M, M), 1)

    def node_batch(idx):
        idx_f = idx.astype(f32)
        # robot node i (< B) belongs to batch i; human node i belongs to (i-B)//H
        return jnp.where(idx < B, idx_f, jnp.floor((idx_f - B) / float(H)))

    same_batch = node_batch(ri) == node_batch(ci)             # (M, M) bool

    wa = weight("wa")

    def similarity(feat):
        # embedded_gaussian: softmax_row( X @ w_a @ X^T ), restricted to same batch
        xw = jnp.dot(feat, wa, preferred_element_type=f32)                    # (M,128)
        logits = jnp.einsum("nd,md->nm", xw, feat, preferred_element_type=f32)  # (M,M)
        logits = jnp.where(same_batch, logits, jnp.float32(-1e30))
        logits = logits - jnp.max(logits, axis=-1, keepdims=True)
        e = jnp.exp(logits)
        return e / jnp.sum(e, axis=-1, keepdims=True)

    a0 = similarity(x)

    # ---- GCN layers --------------------------------------------------------------
    h_cur = x
    for gname in ("gw1", "gw2")[:NUM_GCN_LAYERS]:
        a = similarity(h_cur) if LAYERWISE_GRAPH else a0
        ah = jnp.dot(a, h_cur, preferred_element_type=f32)                    # (M,128)
        nxt = jnp.maximum(jnp.dot(ah, weight(gname), preferred_element_type=f32), 0.0)
        if SKIP_CONNECTION:
            nxt = nxt + h_cur
        h_cur = nxt

    # state representation = the robot node of every batch element (rows [0, B))
    se = h_cur[0:B, :]                                                        # (B,128)

    # ---- value MLP (hidden dims zero-padded 100 -> 128 in the wrapper) -----------
    v = dense(se, "vw1", "vb1")
    v = dense(v, "vw2", "vb2")
    v = dense(v, "vw3", "vb3")

    # final (*, 1) layer: VPU multiply + lane reduction instead of an N=1 MXU pass
    w4 = bias("w4r")                                      # (1, 128) = vw4^T padded
    b4 = bias("b4")[:, 0:1]                               # (1, 1)
    out = jnp.sum(v * w4, axis=-1, keepdims=True) + b4    # (B, 1)
    out_ref[...] = out.astype(out_ref.dtype)


# ----------------------------- packing helpers --------------------------------
def pack_params(params):
    """Pack all weights/biases into one zero-padded (PARAM_ROWS, 128) f32 buffer.

    Call once (weights are fixed across rollout steps) so the hot path does a
    single parameter DMA with no per-call repacking.
    """
    (wr1, br1, wr2, br2, wh1, bh1, wh2, bh2, wa, gw1, gw2,
     vw1, vb1, vw2, vb2, vw3, vb3, vw4, vb4) = params
    named = dict(wr1=wr1, br1=br1, wr2=wr2, br2=br2, wh1=wh1, bh1=bh1,
                 wh2=wh2, bh2=bh2, wa=wa, gw1=gw1, gw2=gw2,
                 vw1=vw1, vb1=vb1, vw2=vw2, vb2=vb2, vw3=vw3, vb3=vb3,
                 w4r=vw4.T, b4=vb4)
    blocks = []
    for name, shape, rows in _PARAM_SPECS:
        a = jnp.asarray(named[name], jnp.float32)
        assert a.shape == tuple(shape), (name, a.shape, shape)
        blocks.append(jnp.pad(a, ((0, rows - a.shape[0]), (0, LANE - a.shape[1]))))
    return jnp.concatenate(blocks, axis=0)


def _pack_states(robot_state, human_states):
    B = robot_state.shape[0]
    H = human_states.shape[1]
    r = robot_state.reshape(B, -1).astype(jnp.float32)          # (B, ROBOT_DIM)
    h = human_states.reshape(B * H, -1).astype(jnp.float32)     # (B*H, HUMAN_DIM)
    r = jnp.pad(r, ((0, _ru8(B) - B), (0, LANE - r.shape[1])))
    h = jnp.pad(h, ((0, _ru8(B * H) - B * H), (0, LANE - h.shape[1])))
    return jnp.concatenate([r, h], axis=0)                      # (rows, 128)


def value_estimator(robot_state, human_states, packed_params):
    B = robot_state.shape[0]
    H = human_states.shape[1]
    states = _pack_states(robot_state, human_states)
    kernel = functools.partial(_value_estimator_kernel, batch=B, num_humans=H,
                               robot_rows=_ru8(B))
    vmem = pl.BlockSpec(memory_space=pltpu.MemorySpace.VMEM)
    # Total footprint < 1 MiB -> no grid. If B ever scales to thousands, tile the
    # batch axis with a BlockSpec grid and mark it "parallel".
    return pl.pallas_call(
        kernel,
        out_shape=jax.ShapeDtypeStruct((B, 1), jnp.float32),
        in_specs=[vmem, vmem],
        out_specs=vmem,
    )(packed_params, states)


# ----------------------------- pure-JAX reference ----------------------------
def reference(robot_state, human_states, params):
    (wr1, br1, wr2, br2, wh1, bh1, wh2, bh2, wa, gw1, gw2,
     vw1, vb1, vw2, vb2, vw3, vb3, vw4, vb4) = params

    def dense(x, w, b, relu=True):
        y = x @ w + b
        return jnp.maximum(y, 0.0) if relu else y

    def similarity(xm):
        logits = xm @ wa @ xm.T
        logits = logits - jnp.max(logits, axis=-1, keepdims=True)
        e = jnp.exp(logits)
        return e / jnp.sum(e, axis=-1, keepdims=True)

    outs = []
    for b in range(robot_state.shape[0]):
        r_emb = dense(dense(robot_state[b], wr1, br1), wr2, br2)
        h_emb = dense(dense(human_states[b], wh1, bh1), wh2, bh2)
        x = jnp.concatenate([r_emb, h_emb], axis=0)
        a0 = similarity(x)
        h_cur = x
        for gw in (gw1, gw2):
            a = similarity(h_cur) if LAYERWISE_GRAPH else a0
            nxt = jnp.maximum(a @ h_cur @ gw, 0.0)
            if SKIP_CONNECTION:
                nxt = nxt + h_cur
            h_cur = nxt
        outs.append(h_cur[0:1, :])
    se = jnp.concatenate(outs, axis=0)
    v = dense(se, vw1, vb1)
    v = dense(v, vw2, vb2)
    v = dense(v, vw3, vb3)
    return dense(v, vw4, vb4, relu=False)


# ----------------------------- parameter init --------------------------------
def make_params(key):
    def lin(k, din, dout, scale=0.1):
        kw, kb = jax.random.split(k)
        return (scale * jax.random.normal(kw, (din, dout), jnp.float32),
                scale * jax.random.normal(kb, (1, dout), jnp.float32))

    keys = jax.random.split(key, 12)
    wr1, br1 = lin(keys[0], ROBOT_DIM, WR_DIMS[0])
    wr2, br2 = lin(keys[1], WR_DIMS[0], WR_DIMS[1])
    wh1, bh1 = lin(keys[2], HUMAN_DIM, WH_DIMS[0])
    wh2, bh2 = lin(keys[3], WH_DIMS[0], WH_DIMS[1])
    wa = jax.random.normal(keys[4], (X_DIM, X_DIM), jnp.float32) * 0.1
    gw1 = jax.random.normal(keys[5], (X_DIM, X_DIM), jnp.float32) * 0.1
    gw2 = jax.random.normal(keys[6], (X_DIM, X_DIM), jnp.float32) * 0.1
    vw1, vb1 = lin(keys[7], X_DIM, VALUE_DIMS[0])
    vw2, vb2 = lin(keys[8], VALUE_DIMS[0], VALUE_DIMS[1])
    vw3, vb3 = lin(keys[9], VALUE_DIMS[1], VALUE_DIMS[2])
    vw4, vb4 = lin(keys[10], VALUE_DIMS[2], VALUE_DIMS[3])
    return (wr1, br1, wr2, br2, wh1, bh1, wh2, bh2, wa, gw1, gw2,
            vw1, vb1, vw2, vb2, vw3, vb3, vw4, vb4)


if __name__ == "__main__":
    key = jax.random.PRNGKey(0)
    k_r, k_h, k_p = jax.random.split(key, 3)

    robot_state = jax.random.normal(k_r, (BATCH, 1, ROBOT_DIM), jnp.float32)
    human_states = jax.random.normal(k_h, (BATCH, NUM_HUMANS, HUMAN_DIM), jnp.float32)
    params = make_params(k_p)

    packed_params = jax.block_until_ready(pack_params(params))   # one-time packing

    value = jax.jit(value_estimator)(robot_state, human_states, packed_params)
    value = jax.block_until_ready(value)

    ref = reference(robot_state, human_states, params)
    np.testing.assert_allclose(np.asarray(value), np.asarray(ref),
                               rtol=2e-2, atol=2e-3)

    assert value.shape == (BATCH, 1)
    print("KERNEL_OK")
</pallas_src>

<mosaic_0001>
module attributes {stable_mosaic.version = 11 : i64} {
  func.func @_value_estimator_kernel(%arg0: memref<1352x128xf32, #tpu.memory_space<vmem>>, %arg1: memref<24x128xf32, #tpu.memory_space<vmem>>, %arg2: memref<2x1xf32, #tpu.memory_space<vmem>>) attributes {dimension_semantics = [], scalar_prefetch = 0 : i64, scratch_operands = 0 : i64, tpu.core_type = #tpu.core_type<tc>} {
    %c0 = arith.constant 0 : index
    %c0_0 = arith.constant 0 : index
    %0 = vector.load %arg1[%c0, %c0_0] : memref<24x128xf32, #tpu.memory_space<vmem>>, vector<2x128xf32>
    %c8 = arith.constant 8 : index
    %c0_1 = arith.constant 0 : index
    %1 = vector.load %arg1[%c8, %c0_1] : memref<24x128xf32, #tpu.memory_space<vmem>>, vector<10x128xf32>
    %c0_2 = arith.constant 0 : index
    %c0_3 = arith.constant 0 : index
    %2 = vector.load %arg0[%c0_2, %c0_3] : memref<1352x128xf32, #tpu.memory_space<vmem>>, vector<128x128xf32>
    %cst = arith.constant dense<0.000000e+00> : vector<2x128xf32>
    %3 = tpu.matmul %0, %2, %cst {dimension_numbers = #tpu.dot_dimension_numbers<[1], [0], [0], [1], [0, 0, 1, 1], [], []>} : vector<2x128xf32>, vector<128x128xf32>, vector<2x128xf32> -> vector<2x128xf32>
    %c128 = arith.constant 128 : index
    %c0_4 = arith.constant 0 : index
    %4 = vector.load %arg0[%c128, %c0_4] : memref<1352x128xf32, #tpu.memory_space<vmem>>, vector<1x128xf32>
    %5 = vector.broadcast %4 : vector<1x128xf32> to vector<2x128xf32>
    %6 = arith.addf %3, %5 : vector<2x128xf32>
    %cst_5 = arith.constant 0.000000e+00 : f32
    %7 = vector.broadcast %cst_5 : f32 to vector<2x128xf32>
    %8 = arith.maximumf %6, %7 : vector<2x128xf32>
    %c136 = arith.constant 136 : index
    %c0_6 = arith.constant 0 : index
    %9 = vector.load %arg0[%c136, %c0_6] : memref<1352x128xf32, #tpu.memory_space<vmem>>, vector<128x128xf32>
    %cst_7 = arith.constant dense<0.000000e+00> : vector<2x128xf32>
    %10 = tpu.matmul %8, %9, %cst_7 {dimension_numbers = #tpu.dot_dimension_numbers<[1], [0], [0], [1], [0, 0, 1, 1], [], []>} : vector<2x128xf32>, vector<128x128xf32>, vector<2x128xf32> -> vector<2x128xf32>
    %c264 = arith.constant 264 : index
    %c0_8 = arith.constant 0 : index
    %11 = vector.load %arg0[%c264, %c0_8] : memref<1352x128xf32, #tpu.memory_space<vmem>>, vector<1x128xf32>
    %12 = vector.broadcast %11 : vector<1x128xf32> to vector<2x128xf32>
    %13 = arith.addf %10, %12 : vector<2x128xf32>
    %cst_9 = arith.constant 0.000000e+00 : f32
    %14 = vector.broadcast %cst_9 : f32 to vector<2x128xf32>
    %15 = arith.maximumf %13, %14 : vector<2x128xf32>
    %c272 = arith.constant 272 : index
    %c0_10 = arith.constant 0 : index
    %16 = vector.load %arg0[%c272, %c0_10] : memref<1352x128xf32, #tpu.memory_space<vmem>>, vector<128x128xf32>
    %cst_11 = arith.constant dense<0.000000e+00> : vector<10x128xf32>
    %17 = tpu.matmul %1, %16, %cst_11 {dimension_numbers = #tpu.dot_dimension_numbers<[1], [0], [0], [1], [0, 0, 1, 1], [], []>} : vector<10x128xf32>, vector<128x128xf32>, vector<10x128xf32> -> vector<10x128xf32>
    %c400 = arith.constant 400 : index
    %c0_12 = arith.constant 0 : index
    %18 = vector.load %arg0[%c400, %c0_12] : memref<1352x128xf32, #tpu.memory_space<vmem>>, vector<1x128xf32>
    %19 = vector.broadcast %18 : vector<1x128xf32> to vector<10x128xf32>
    %20 = arith.addf %17, %19 : vector<10x128xf32>
    %cst_13 = arith.constant 0.000000e+00 : f32
    %21 = vector.broadcast %cst_13 : f32 to vector<10x128xf32>
    %22 = arith.maximumf %20, %21 : vector<10x128xf32>
    %c408 = arith.constant 408 : index
    %c0_14 = arith.constant 0 : index
    %23 = vector.load %arg0[%c408, %c0_14] : memref<1352x128xf32, #tpu.memory_space<vmem>>, vector<128x128xf32>
    %cst_15 = arith.constant dense<0.000000e+00> : vector<10x128xf32>
    %24 = tpu.matmul %22, %23, %cst_15 {dimension_numbers = #tpu.dot_dimension_numbers<[1], [0], [0], [1], [0, 0, 1, 1], [], []>} : vector<10x128xf32>, vector<128x128xf32>, vector<10x128xf32> -> vector<10x128xf32>
    %c536 = arith.constant 536 : index
    %c0_16 = arith.constant 0 : index
    %25 = vector.load %arg0[%c536, %c0_16] : memref<1352x128xf32, #tpu.memory_space<vmem>>, vector<1x128xf32>
    %26 = vector.broadcast %25 : vector<1x128xf32> to vector<10x128xf32>
    %27 = arith.addf %24, %26 : vector<10x128xf32>
    %cst_17 = arith.constant 0.000000e+00 : f32
    %28 = vector.broadcast %cst_17 : f32 to vector<10x128xf32>
    %29 = arith.maximumf %27, %28 : vector<10x128xf32>
    %30 = tpu.concatenate %15, %29 in 0 : vector<2x128xf32>, vector<10x128xf32> -> vector<12x128xf32>
    %31 = tpu.iota {dimensions = array<i32: 0>} : vector<12x12xi32>
    %32 = tpu.iota {dimensions = array<i32: 1>} : vector<12x12xi32>
    %33 = arith.sitofp %31 : vector<12x12xi32> to vector<12x12xf32>
    %c2_i32 = arith.constant 2 : i32
    %34 = vector.broadcast %c2_i32 : i32 to vector<12x12xi32>
    %35 = arith.cmpi slt, %31, %34 : vector<12x12xi32>
    %cst_18 = arith.constant 2.000000e+00 : f32
    %36 = vector.broadcast %cst_18 : f32 to vector<12x12xf32>
    %37 = arith.subf %33, %36 : vector<12x12xf32>
    %cst_19 = arith.constant 5.000000e+00 : f32
    %38 = vector.broadcast %cst_19 : f32 to vector<12x12xf32>
    %39 = arith.divf %37, %38 : vector<12x12xf32>
    %40 = math.floor %39 : vector<12x12xf32>
    %41 = arith.select %35, %33, %40 : vector<12x12xi1>, vector<12x12xf32>
    %42 = arith.sitofp %32 : vector<12x12xi32> to vector<12x12xf32>
    %c2_i32_20 = arith.constant 2 : i32
    %43 = vector.broadcast %c2_i32_20 : i32 to vector<12x12xi32>
    %44 = arith.cmpi slt, %32, %43 : vector<12x12xi32>
    %cst_21 = arith.constant 2.000000e+00 : f32
    %45 = vector.broadcast %cst_21 : f32 to vector<12x12xf32>
    %46 = arith.subf %42, %45 : vector<12x12xf32>
    %cst_22 = arith.constant 5.000000e+00 : f32
    %47 = vector.broadcast %cst_22 : f32 to vector<12x12xf32>
    %48 = arith.divf %46, %47 : vector<12x12xf32>
    %49 = math.floor %48 : vector<12x12xf32>
    %50 = arith.select %44, %42, %49 : vector<12x12xi1>, vector<12x12xf32>
    %51 = arith.cmpf oeq, %41, %50 : vector<12x12xf32>
    %c544 = arith.constant 544 : index
    %c0_23 = arith.constant 0 : index
    %52 = vector.load %arg0[%c544, %c0_23] : memref<1352x128xf32, #tpu.memory_space<vmem>>, vector<128x128xf32>
    %cst_24 = arith.constant dense<0.000000e+00> : vector<12x128xf32>
    %53 = tpu.matmul %30, %52, %cst_24 {dimension_numbers = #tpu.dot_dimension_numbers<[1], [0], [0], [1], [0, 0, 1, 1], [], []>} : vector<12x128xf32>, vector<128x128xf32>, vector<12x128xf32> -> vector<12x128xf32>
    "tpu.trace_start"() <{level = 10 : i32, message = "nd,md->nm"}> : () -> ()
    %cst_25 = arith.constant dense<0.000000e+00> : vector<12x12xf32>
    %54 = tpu.matmul %53, %30, %cst_25 {dimension_numbers = #tpu.dot_dimension_numbers<[1], [1], [0], [0], [0, 0, 1, 0], [], []>} : vector<12x128xf32>, vector<12x128xf32>, vector<12x12xf32> -> vector<12x12xf32>
    %cst_26 = arith.constant -1.000000e+30 : f32
    "tpu.trace_stop"() : () -> ()
    %55 = vector.broadcast %cst_26 : f32 to vector<12x12xf32>
    %56 = arith.select %51, %54, %55 : vector<12x12xi1>, vector<12x12xf32>
    %cst_27 = arith.constant dense<0xFF800000> : vector<12xf32>
    %57 = vector.multi_reduction <maximumf>, %56, %cst_27 [1] : vector<12x12xf32> to vector<12xf32>
    %58 = vector.shape_cast %57 : vector<12xf32> to vector<12x1xf32>
    %59 = vector.broadcast %58 : vector<12x1xf32> to vector<12x12xf32>
    %60 = arith.subf %56, %59 : vector<12x12xf32>
    %61 = math.exp %60 : vector<12x12xf32>
    %cst_28 = arith.constant dense<0.000000e+00> : vector<12xf32>
    %62 = vector.multi_reduction <add>, %61, %cst_28 [1] : vector<12x12xf32> to vector<12xf32>
    %63 = vector.shape_cast %62 : vector<12xf32> to vector<12x1xf32>
    %64 = vector.broadcast %63 : vector<12x1xf32> to vector<12x12xf32>
    %65 = arith.divf %61, %64 : vector<12x12xf32>
    %cst_29 = arith.constant dense<0.000000e+00> : vector<12x128xf32>
    %66 = tpu.matmul %65, %30, %cst_29 {dimension_numbers = #tpu.dot_dimension_numbers<[1], [0], [0], [1], [0, 0, 1, 1], [], []>} : vector<12x12xf32>, vector<12x128xf32>, vector<12x128xf32> -> vector<12x128xf32>
    %c672 = arith.constant 672 : index
    %c0_30 = arith.constant 0 : index
    %67 = vector.load %arg0[%c672, %c0_30] : memref<1352x128xf32, #tpu.memory_space<vmem>>, vector<128x128xf32>
    %cst_31 = arith.constant dense<0.000000e+00> : vector<12x128xf32>
    %68 = tpu.matmul %66, %67, %cst_31 {dimension_numbers = #tpu.dot_dimension_numbers<[1], [0], [0], [1], [0, 0, 1, 1], [], []>} : vector<12x128xf32>, vector<128x128xf32>, vector<12x128xf32> -> vector<12x128xf32>
    %cst_32 = arith.constant 0.000000e+00 : f32
    %69 = vector.broadcast %cst_32 : f32 to vector<12x128xf32>
    %70 = arith.maximumf %68, %69 : vector<12x128xf32>
    %71 = arith.addf %70, %30 : vector<12x128xf32>
    %cst_33 = arith.constant dense<0.000000e+00> : vector<12x128xf32>
    %72 = tpu.matmul %65, %71, %cst_33 {dimension_numbers = #tpu.dot_dimension_numbers<[1], [0], [0], [1], [0, 0, 1, 1], [], []>} : vector<12x12xf32>, vector<12x128xf32>, vector<12x128xf32> -> vector<12x128xf32>
    %c800 = arith.constant 800 : index
    %c0_34 = arith.constant 0 : index
    %73 = vector.load %arg0[%c800, %c0_34] : memref<1352x128xf32, #tpu.memory_space<vmem>>, vector<128x128xf32>
    %cst_35 = arith.constant dense<0.000000e+00> : vector<12x128xf32>
    %74 = tpu.matmul %72, %73, %cst_35 {dimension_numbers = #tpu.dot_dimension_numbers<[1], [0], [0], [1], [0, 0, 1, 1], [], []>} : vector<12x128xf32>, vector<128x128xf32>, vector<12x128xf32> -> vector<12x128xf32>
    %cst_36 = arith.constant 0.000000e+00 : f32
    %75 = vector.broadcast %cst_36 : f32 to vector<12x128xf32>
    %76 = arith.maximumf %74, %75 : vector<12x128xf32>
    %77 = arith.addf %76, %71 : vector<12x128xf32>
    %78 = vector.extract_strided_slice %77 {offsets = [0, 0], sizes = [2, 128], strides = [1, 1]} : vector<12x128xf32> to vector<2x128xf32>
    %c928 = arith.constant 928 : index
    %c0_37 = arith.constant 0 : index
    %79 = vector.load %arg0[%c928, %c0_37] : memref<1352x128xf32, #tpu.memory_space<vmem>>, vector<128x128xf32>
    %cst_38 = arith.constant dense<0.000000e+00> : vector<2x128xf32>
    %80 = tpu.matmul %78, %79, %cst_38 {dimension_numbers = #tpu.dot_dimension_numbers<[1], [0], [0], [1], [0, 0, 1, 1], [], []>} : vector<2x128xf32>, vector<128x128xf32>, vector<2x128xf32> -> vector<2x128xf32>
    %c1056 = arith.constant 1056 : index
    %c0_39 = arith.constant 0 : index
    %81 = vector.load %arg0[%c1056, %c0_39] : memref<1352x128xf32, #tpu.memory_space<vmem>>, vector<1x128xf32>
    %82 = vector.broadcast %81 : vector<1x128xf32> to vector<2x128xf32>
    %83 = arith.addf %80, %82 : vector<2x128xf32>
    %cst_40 = arith.constant 0.000000e+00 : f32
    %84 = vector.broadcast %cst_40 : f32 to vector<2x128xf32>
    %85 = arith.maximumf %83, %84 : vector<2x128xf32>
    %c1064 = arith.constant 1064 : index
    %c0_41 = arith.constant 0 : index
    %86 = vector.load %arg0[%c1064, %c0_41] : memref<1352x128xf32, #tpu.memory_space<vmem>>, vector<128x128xf32>
    %cst_42 = arith.constant dense<0.000000e+00> : vector<2x128xf32>
    %87 = tpu.matmul %85, %86, %cst_42 {dimension_numbers = #tpu.dot_dimension_numbers<[1], [0], [0], [1], [0, 0, 1, 1], [], []>} : vector<2x128xf32>, vector<128x128xf32>, vector<2x128xf32> -> vector<2x128xf32>
    %c1192 = arith.constant 1192 : index
    %c0_43 = arith.constant 0 : index
    %88 = vector.load %arg0[%c1192, %c0_43] : memref<1352x128xf32, #tpu.memory_space<vmem>>, vector<1x128xf32>
    %89 = vector.broadcast %88 : vector<1x128xf32> to vector<2x128xf32>
    %90 = arith.addf %87, %89 : vector<2x128xf32>
    %cst_44 = arith.constant 0.000000e+00 : f32
    %91 = vector.broadcast %cst_44 : f32 to vector<2x128xf32>
    %92 = arith.maximumf %90, %91 : vector<2x128xf32>
    %c1200 = arith.constant 1200 : index
    %c0_45 = arith.constant 0 : index
    %93 = vector.load %arg0[%c1200, %c0_45] : memref<1352x128xf32, #tpu.memory_space<vmem>>, vector<128x128xf32>
    %cst_46 = arith.constant dense<0.000000e+00> : vector<2x128xf32>
    %94 = tpu.matmul %92, %93, %cst_46 {dimension_numbers = #tpu.dot_dimension_numbers<[1], [0], [0], [1], [0, 0, 1, 1], [], []>} : vector<2x128xf32>, vector<128x128xf32>, vector<2x128xf32> -> vector<2x128xf32>
    %c1328 = arith.constant 1328 : index
    %c0_47 = arith.constant 0 : index
    %95 = vector.load %arg0[%c1328, %c0_47] : memref<1352x128xf32, #tpu.memory_space<vmem>>, vector<1x128xf32>
    %96 = vector.broadcast %95 : vector<1x128xf32> to vector<2x128xf32>
    %97 = arith.addf %94, %96 : vector<2x128xf32>
    %cst_48 = arith.constant 0.000000e+00 : f32
    %98 = vector.broadcast %cst_48 : f32 to vector<2x128xf32>
    %99 = arith.maximumf %97, %98 : vector<2x128xf32>
    %c1336 = arith.constant 1336 : index
    %c0_49 = arith.constant 0 : index
    %100 = vector.load %arg0[%c1336, %c0_49] : memref<1352x128xf32, #tpu.memory_space<vmem>>, vector<1x128xf32>
    %c1344 = arith.constant 1344 : index
    %c0_50 = arith.constant 0 : index
    %101 = vector.load %arg0[%c1344, %c0_50] : memref<1352x128xf32, #tpu.memory_space<vmem>>, vector<1x128xf32>
    %102 = vector.extract_strided_slice %101 {offsets = [0, 0], sizes = [1, 1], strides = [1, 1]} : vector<1x128xf32> to vector<1x1xf32>
    %103 = vector.broadcast %100 : vector<1x128xf32> to vector<2x128xf32>
    %104 = arith.mulf %99, %103 : vector<2x128xf32>
    %cst_51 = arith.constant dense<0.000000e+00> : vector<2xf32>
    %105 = vector.multi_reduction <add>, %104, %cst_51 [1] : vector<2x128xf32> to vector<2xf32>
    %106 = vector.shape_cast %105 : vector<2xf32> to vector<2x1xf32>
    %107 = vector.broadcast %102 : vector<1x1xf32> to vector<2x1xf32>
    %108 = arith.addf %106, %107 : vector<2x1xf32>
    %c0_52 = arith.constant 0 : index
    %c0_53 = arith.constant 0 : index
    %109 = vector.load %arg2[%c0_52, %c0_53] : memref<2x1xf32, #tpu.memory_space<vmem>>, vector<2x1xf32>
    tpu.vector_store %arg2[%c0_52, %c0_53], %108 {strides = array<i32>} : memref<2x1xf32, #tpu.memory_space<vmem>>, vector<2x1xf32>,
    return
  }
}

</mosaic_0001>

<llo_original>
// kernel: value_estimator.1
$region0: #{value_estimator.1}
  #allocation0 [shape = 'u32[]', space=smem, size = 0x4, offset = 0x4, fixed_abs, tag = 'smem constant byte address 0x4 - core index']
  #allocation1 [shape = 'u32[72,128]{1,0:T(1,128)}', space=vmem, size = 0x9000, scoped, tag = 'internal scratch']
  %s0 = inlined_call_operand.hbm [shape: f32[1352,128], index: 0, kind: input, shape index: {}]
  %s1 = inlined_call_operand.vmem [shape: f32[24,128], index: 1, kind: input, shape index: {}]
  %s2 = inlined_call_operand.vmem [shape: f32[2,1], index: 2, kind: output, shape index: {}]
  %s3 = sld [smem:[#allocation0]]
  $region22: #{value_estimator.1} parent=0
    _
  %s5 = ssub.s32 1, %s3
  %s6 = scalar_select 0, %s5, %s3
  $region1: #{value_estimator.1} parent=0
    #allocation2 [shape = 'u8[692224]{0}', space=vmem, size = 0xa9000, scoped, tag = 'input window, operand 0, single buffered']
    #allocation3 [shape = 's32[1]{0}', space=sflag, size = 0x4, scoped, tag = 'scoped memory for value_estimator.1']
    %7 = vsyncpa [#allocation3], 0
    // Predicated region
    $region2: #{value_estimator.1} parent=1 // pred_check
      _
    $region3: #{value_estimator.1} parent=1 // pred_check_branch
      %9 = sbr.rel (0) target = $region5
    $region4: #{value_estimator.1} parent=1 // pred_region
      %11 = vsyncadd [#allocation3], 0
      %s12 = sshll.u32 %s0, 4
      %s13 = int_to_ptr.hbm [resolvable:$true] %s12
      %s14 = sshll.u32 [#allocation2], 4
      %s15 = int_to_ptr.vmem [resolvable:$true] %s14
      %20 = dma.hbm_to_vmem [thread:$0]  %s13, 21632, %s15, [#allocation3], 128, 128, 8
    $region5: #{value_estimator.1} parent=1 // pred_fallthru
      _
    // Predicated region
    $region6: #{value_estimator.1} parent=1 // pred_check
      _
    $region7: #{value_estimator.1} parent=1 // pred_check_branch
      %22 = sbr.rel (0) target = $region9
    $region8: #{value_estimator.1} parent=1 // pred_region
      _
    $region9: #{value_estimator.1} parent=1 // pred_fallthru
      _
    // Predicated region
    $region10: #{value_estimator.1} parent=1 // pred_check
      _
    $region11: #{value_estimator.1} parent=1 // pred_check_branch
      %24 = sbr.rel (0) target = $region13
    $region12: #{value_estimator.1} parent=1 // pred_region
      %26 = dma.done [#allocation3], 21632
    $region13: #{value_estimator.1} parent=1 // pred_fallthru
      _
    %v27 = vld [vmem:[%s1] sm:$0x3]
    %v28 = vld [vmem:[%s1 + $0x8] sm:$0xff]
    %v29 = vld [vmem:[%s1 + $0x10] sm:$0x3]
    %v30 = vld [vmem:[#allocation2] sm:$0xff]
    %v31 = vld [vmem:[#allocation2 + $0x8] sm:$0xff]
    %v32 = vld [vmem:[#allocation2 + $0x10] sm:$0xff]
    %v33 = vld [vmem:[#allocation2 + $0x18] sm:$0xff]
    %v34 = vld [vmem:[#allocation2 + $0x20] sm:$0xff]
    %v35 = vld [vmem:[#allocation2 + $0x28] sm:$0xff]
    %v36 = vld [vmem:[#allocation2 + $0x30] sm:$0xff]
    %v37 = vld [vmem:[#allocation2 + $0x38] sm:$0xff]
    %v38 = vld [vmem:[#allocation2 + $0x40] sm:$0xff]
    %v39 = vld [vmem:[#allocation2 + $0x48] sm:$0xff]
    %v40 = vld [vmem:[#allocation2 + $0x50] sm:$0xff]
    %v41 = vld [vmem:[#allocation2 + $0x58] sm:$0xff]
    %v42 = vld [vmem:[#allocation2 + $0x60] sm:$0xff]
    %v43 = vld [vmem:[#allocation2 + $0x68] sm:$0xff]
    %v44 = vld [vmem:[#allocation2 + $0x70] sm:$0xff]
    %v45 = vld [vmem:[#allocation2 + $0x78] sm:$0xff]
    %v46 = vld [vmem:[#allocation2 + $0x80] sm:$0x1]
    %v47 = vperm.slane %v46, 0
    %48 = vmatpush.msra.mxu0 %v45
    %49 = vmatpush.msra.mxu0 %v44
    %50 = vmatpush.msra.mxu0 %v43
    %51 = vmatpush.msra.mxu0 %v42
    %52 = vmatpush.msra.mxu0 %v41
    %53 = vmatpush.msra.mxu0 %v40
    %54 = vmatpush.msra.mxu0 %v39
    %55 = vmatpush.msra.mxu0 %v38
    %56 = vmatpush.msra.mxu0 %v37
    %57 = vmatpush.msra.mxu0 %v36
    %58 = vmatpush.msra.mxu0 %v35
    %59 = vmatpush.msra.mxu0 %v34
    %60 = vmatpush.msra.mxu0 %v33
    %61 = vmatpush.msra.mxu0 %v32
    %62 = vmatpush.msra.mxu0 %v31
    %63 = vmatpush.msra.mxu0 %v30
    %64 = vmatmul.f32.gmra.mxu0 %v27
    %v65 = vpop.f32.mrf.mxu0
    %v66 = vadd.f32 %v47, %v65
    %67 = vdwg.mxu0
    %v68 = vmax.f32 %v66, 0.0
    %v69 = vld [vmem:[#allocation2 + $0x88] sm:$0xff]
    %v70 = vld [vmem:[#allocation2 + $0x90] sm:$0xff]
    %v71 = vld [vmem:[#allocation2 + $0x98] sm:$0xff]
    %v72 = vld [vmem:[#allocation2 + $0xa0] sm:$0xff]
    %v73 = vld [vmem:[#allocation2 + $0xa8] sm:$0xff]
    %v74 = vld [vmem:[#allocation2 + $0xb0] sm:$0xff]
    %v75 = vld [vmem:[#allocation2 + $0xb8] sm:$0xff]
    %v76 = vld [vmem:[#allocation2 + $0xc0] sm:$0xff]
    %v77 = vld [vmem:[#allocation2 + $0xc8] sm:$0xff]
    %v78 = vld [vmem:[#allocation2 + $0xd0] sm:$0xff]
    %v79 = vld [vmem:[#allocation2 + $0xd8] sm:$0xff]
    %v80 = vld [vmem:[#allocation2 + $0xe0] sm:$0xff]
    %v81 = vld [vmem:[#allocation2 + $0xe8] sm:$0xff]
    %v82 = vld [vmem:[#allocation2 + $0xf0] sm:$0xff]
    %v83 = vld [vmem:[#allocation2 + $0xf8] sm:$0xff]
    %v84 = vld [vmem:[#allocation2 + $0x100] sm:$0xff]
    %v85 = vld [vmem:[#allocation2 + $0x108] sm:$0x1]
    %v86 = vperm.slane %v85, 0
    %87 = vmatpush.msra.mxu0 %v84
    %88 = vmatpush.msra.mxu0 %v83
    %89 = vmatpush.msra.mxu0 %v82
    %90 = vmatpush.msra.mxu0 %v81
    %91 = vmatpush.msra.mxu0 %v80
    %92 = vmatpush.msra.mxu0 %v79
    %93 = vmatpush.msra.mxu0 %v78
    %94 = vmatpush.msra.mxu0 %v77
    %95 = vmatpush.msra.mxu0 %v76
    %96 = vmatpush.msra.mxu0 %v75
    %97 = vmatpush.msra.mxu0 %v74
    %98 = vmatpush.msra.mxu0 %v73
    %99 = vmatpush.msra.mxu0 %v72
    %100 = vmatpush.msra.mxu0 %v71
    %101 = vmatpush.msra.mxu0 %v70
    %102 = vmatpush.msra.mxu0 %v69
    %103 = vmatmul.f32.gmra.mxu0 %v68
    %v104 = vpop.f32.mrf.mxu0
    %v105 = vadd.f32 %v86, %v104
    %106 = vdwg.mxu0
    %v107 = vmax.f32 %v105, 0.0
    %v108 = vld [vmem:[#allocation2 + $0x110] sm:$0xff]
    %v109 = vld [vmem:[#allocation2 + $0x118] sm:$0xff]
    %v110 = vld [vmem:[#allocation2 + $0x120] sm:$0xff]
    %v111 = vld [vmem:[#allocation2 + $0x128] sm:$0xff]
    %v112 = vld [vmem:[#allocation2 + $0x130] sm:$0xff]
    %v113 = vld [vmem:[#allocation2 + $0x138] sm:$0xff]
    %v114 = vld [vmem:[#allocation2 + $0x140] sm:$0xff]
    %v115 = vld [vmem:[#allocation2 + $0x148] sm:$0xff]
    %v116 = vld [vmem:[#allocation2 + $0x150] sm:$0xff]
    %v117 = vld [vmem:[#allocation2 + $0x158] sm:$0xff]
    %v118 = vld [vmem:[#allocation2 + $0x160] sm:$0xff]
    %v119 = vld [vmem:[#allocation2 + $0x168] sm:$0xff]
    %v120 = vld [vmem:[#allocation2 + $0x170] sm:$0xff]
    %v121 = vld [vmem:[#allocation2 + $0x178] sm:$0xff]
    %v122 = vld [vmem:[#allocation2 + $0x180] sm:$0xff]
    %v123 = vld [vmem:[#allocation2 + $0x188] sm:$0xff]
    %v124 = vld [vmem:[#allocation2 + $0x190] sm:$0x1]
    %v125 = vperm.slane %v124, 0
    %126 = vmatpush.msra.mxu0 %v123
    %127 = vmatpush.msra.mxu0 %v122
    %128 = vmatpush.msra.mxu0 %v121
    %129 = vmatpush.msra.mxu0 %v120
    %130 = vmatpush.msra.mxu0 %v119
    %131 = vmatpush.msra.mxu0 %v118
    %132 = vmatpush.msra.mxu0 %v117
    %133 = vmatpush.msra.mxu0 %v116
    %134 = vmatpush.msra.mxu0 %v115
    %135 = vmatpush.msra.mxu0 %v114
    %136 = vmatpush.msra.mxu0 %v113
    %137 = vmatpush.msra.mxu0 %v112
    %138 = vmatpush.msra.mxu0 %v111
    %139 = vmatpush.msra.mxu0 %v110
    %140 = vmatpush.msra.mxu0 %v109
    %141 = vmatpush.msra.mxu0 %v108
    %142 = vmatmul.f32.gmra.mxu0 %v28
    %v143 = vpop.f32.mrf.mxu0
    %v144 = vadd.f32 %v125, %v143
    %145 = vmatmul.f32.gmra.mxu0 %v29
    %v146 = vpop.f32.mrf.mxu0
    %v147 = vadd.f32 %v125, %v146
    %148 = vdwg.mxu0
    %v149 = vmax.f32 %v144, 0.0
    %v150 = vmax.f32 %v147, 0.0
    %v151 = vld [vmem:[#allocation2 + $0x198] sm:$0xff]
    %v152 = vld [vmem:[#allocation2 + $0x1a0] sm:$0xff]
    %v153 = vld [vmem:[#allocation2 + $0x1a8] sm:$0xff]
    %v154 = vld [vmem:[#allocation2 + $0x1b0] sm:$0xff]
    %v155 = vld [vmem:[#allocation2 + $0x1b8] sm:$0xff]
    %v156 = vld [vmem:[#allocation2 + $0x1c0] sm:$0xff]
    %v157 = vld [vmem:[#allocation2 + $0x1c8] sm:$0xff]
    %v158 = vld [vmem:[#allocation2 + $0x1d0] sm:$0xff]
    %v159 = vld [vmem:[#allocation2 + $0x1d8] sm:$0xff]
    %v160 = vld [vmem:[#allocation2 + $0x1e0] sm:$0xff]
    %v161 = vld [vmem:[#allocation2 + $0x1e8] sm:$0xff]
    %v162 = vld [vmem:[#allocation2 + $0x1f0] sm:$0xff]
    %v163 = vld [vmem:[#allocation2 + $0x1f8] sm:$0xff]
    %v164 = vld [vmem:[#allocation2 + $0x200] sm:$0xff]
    %v165 = vld [vmem:[#allocation2 + $0x208] sm:$0xff]
    %v166 = vld [vmem:[#allocation2 + $0x210] sm:$0xff]
    %v167 = vld [vmem:[#allocation2 + $0x218] sm:$0x1]
    %v168 = vperm.slane %v167, 0
    %169 = vmatpush.msra.mxu0 %v166
    %170 = vmatpush.msra.mxu0 %v165
    %171 = vmatpush.msra.mxu0 %v164
    %172 = vmatpush.msra.mxu0 %v163
    %173 = vmatpush.msra.mxu0 %v162
    %174 = vmatpush.msra.mxu0 %v161
    %175 = vmatpush.msra.mxu0 %v160
    %176 = vmatpush.msra.mxu0 %v159
    %177 = vmatpush.msra.mxu0 %v158
    %178 = vmatpush.msra.mxu0 %v157
    %179 = vmatpush.msra.mxu0 %v156
    %180 = vmatpush.msra.mxu0 %v155
    %181 = vmatpush.msra.mxu0 %v154
    %182 = vmatpush.msra.mxu0 %v153
    %183 = vmatpush.msra.mxu0 %v152
    %184 = vmatpush.msra.mxu0 %v151
    %185 = vmatmul.f32.gmra.mxu0 %v149
    %v186 = vpop.f32.mrf.mxu0
    %v187 = vadd.f32 %v168, %v186
    %188 = vmatmul.f32.gmra.mxu0 %v150
    %v189 = vpop.f32.mrf.mxu0
    %v190 = vadd.f32 %v168, %v189
    %191 = vdwg.mxu0
    %v192 = vmax.f32 %v187, 0.0
    %v193 = vmax.f32 %v190, 0.0
    %vm196 = vcmask 1041408
    %v197 = vrot.slane %v192, 6
    %v198 = vrot.slane %v193, 6
    %v199 = vsel %vm196, %v197, %v198
    %v202 = vsel %vm196, %v107, %v197
    %v203 = vlaneseq
    %v204 = vshrl.u32 %v203, 7
    %v205 = vadd.s32 %v204, 8
    %v206 = vlaneseq
    %v207 = vand.u32 %v206, 127
    %v208 = vcvt.s32.f32 %v204
    %v209 = vcvt.s32.f32 %v205
    %vm210 = vcmp.lt.s32.totalorder %v204, 2
    %vm211 = vcmp.lt.s32.totalorder %v205, 2
    %v212 = vsub.f32 %v208, 2.0
    %v213 = vsub.f32 %v209, 2.0
    %v214 = vrcp.pop 5.0
    %v215 = vmul.f32 5.0, %v214
    %v216 = vsub.f32 1.0, %v215
    %v217 = vmul.f32 %v214, %v216
    %v218 = vadd.f32 %v214, %v217
    %vm219 = vweird.f32 %v214
    %v220 = vsel %vm219, %v214, %v218
    %v221 = vmul.f32 %v212, %v220
    %v222 = vmul.f32 %v213, %v220
    %v223 = vfloor.f32 %v221
    %v224 = vfloor.f32 %v222
    %v225 = vsel %vm210, %v208, %v223
    %v226 = vsel %vm211, %v209, %v224
    %v227 = vcvt.s32.f32 %v207
    %vm228 = vcmp.lt.s32.totalorder %v207, 2
    %v229 = vsub.f32 %v227, 2.0
    %v230 = vmul.f32 %v229, %v220
    %v231 = vfloor.f32 %v230
    %v232 = vsel %vm228, %v227, %v231
    %vm233 = vcmp.eq.f32.partialorder %v225, %v232
    %vm234 = vcmp.eq.f32.partialorder %v226, %v232
    %v235 = vld [vmem:[#allocation2 + $0x220] sm:$0xff]
    %v236 = vld [vmem:[#allocation2 + $0x228] sm:$0xff]
    %v237 = vld [vmem:[#allocation2 + $0x230] sm:$0xff]
    %v238 = vld [vmem:[#allocation2 + $0x238] sm:$0xff]
    %v239 = vld [vmem:[#allocation2 + $0x240] sm:$0xff]
    %v240 = vld [vmem:[#allocation2 + $0x248] sm:$0xff]
    %v241 = vld [vmem:[#allocation2 + $0x250] sm:$0xff]
    %v242 = vld [vmem:[#allocation2 + $0x258] sm:$0xff]
    %v243 = vld [vmem:[#allocation2 + $0x260] sm:$0xff]
    %v244 = vld [vmem:[#allocation2 + $0x268] sm:$0xff]
    %v245 = vld [vmem:[#allocation2 + $0x270] sm:$0xff]
    %v246 = vld [vmem:[#allocation2 + $0x278] sm:$0xff]
    %v247 = vld [vmem:[#allocation2 + $0x280] sm:$0xff]
    %v248 = vld [vmem:[#allocation2 + $0x288] sm:$0xff]
    %v249 = vld [vmem:[#allocation2 + $0x290] sm:$0xff]
    %v250 = vld [vmem:[#allocation2 + $0x298] sm:$0xff]
    %251 = vmatpush.msra.mxu0 %v250
    %252 = vmatpush.msra.mxu0 %v249
    %253 = vmatpush.msra.mxu0 %v248
    %254 = vmatpush.msra.mxu0 %v247
    %255 = vmatpush.msra.mxu0 %v246
    %256 = vmatpush.msra.mxu0 %v245
    %257 = vmatpush.msra.mxu0 %v244
    %258 = vmatpush.msra.mxu0 %v243
    %259 = vmatpush.msra.mxu0 %v242
    %260 = vmatpush.msra.mxu0 %v241
    %261 = vmatpush.msra.mxu0 %v240
    %262 = vmatpush.msra.mxu0 %v239
    %263 = vmatpush.msra.mxu0 %v238
    %264 = vmatpush.msra.mxu0 %v237
    %265 = vmatpush.msra.mxu0 %v236
    %266 = vmatpush.msra.mxu0 %v235
    %267 = vmatmul.f32.gmra.mxu0 %v202
    %v268 = vpop.f32.mrf.mxu0
    %v269 = vadd.f32 0.0, %v268
    %270 = vmatmul.f32.gmra.mxu0 %v199
    %v271 = vpop.f32.mrf.mxu0
    %v272 = vadd.f32 0.0, %v271
    %273 = vdwg.mxu0
    %274 = vmatpush.xpose.msra.mxu0 0.0
    %275 = vmatpush.xpose.msra.mxu0 0.0
    %276 = vmatpush.xpose.msra.mxu0 0.0
    %277 = vmatpush.xpose.msra.mxu0 0.0
    %278 = vmatpush.xpose.msra.mxu0 0.0
    %279 = vmatpush.xpose.msra.mxu0 0.0
    %280 = vmatpush.xpose.msra.mxu0 0.0
    %281 = vmatpush.xpose.msra.mxu0 0.0
    %282 = vmatpush.xpose.msra.mxu0 0.0
    %283 = vmatpush.xpose.msra.mxu0 0.0
    %284 = vmatpush.xpose.msra.mxu0 0.0
    %285 = vmatpush.xpose.msra.mxu0 0.0
    %286 = vmatpush.xpose.msra.mxu0 0.0
    %287 = vmatpush.xpose.msra.mxu0 0.0
    %288 = vmatpush.xpose.msra.mxu0 %v199
    %289 = vmatpush.xpose.msra.mxu0 %v202
    %290 = vmatmul.f32.gmra.mxu0 %v269
    %v291 = vpop.f32.mrf.mxu0
    %v292 = vadd.f32 0.0, %v291
    %293 = vmatmul.f32.gmra.mxu0 %v272
    %v294 = vpop.f32.mrf.mxu0
    %v295 = vadd.f32 0.0, %v294
    %296 = vdwg.mxu0
    %v297 = vsel %vm233, %v292, -1e+30
    %v298 = vsel %vm234, %v295, -1e+30
    %vm299 = vcmask 97280
    %v300 = vsel %vm299, %v297, -inf
    %301 = vmax.xlane.f32.xlu0 %v300
    %v302 = vpop.xlane.xlu0 %301
    %vm303 = vcmask 93184
    %v304 = vsel %vm303, %v298, -inf
    %305 = vmax.xlane.f32.xlu0 %v304
    %v306 = vpop.xlane.xlu0 %305
    %v307 = vsub.f32 %v297, %v302
    %v308 = vsub.f32 %v298, %v306
    %v309 = vmul.f32 %v307, 1.442695
    %v310 = vpow.pop %v309
    %v311 = vmul.f32 %v308, 1.442695
    %v312 = vpow.pop %v311
    %v313 = vsel %vm299, %v310, 0.0
    %314 = vadd.xlane.f32.xlu0 %v313
    %v315 = vpop.xlane.xlu0 %314
    %v316 = vsel %vm303, %v312, 0.0
    %317 = vadd.xlane.f32.xlu0 %v316
    %v318 = vpop.xlane.xlu0 %317
    %v319 = vrcp.pop %v315
    %v320 = vmul.f32 %v315, %v319
    %v321 = vsub.f32 1.0, %v320
    %v322 = vmul.f32 %v319, %v321
    %v323 = vadd.f32 %v319, %v322
    %vm324 = vweird.f32 %v315
    %vm325 = vweird.f32 %v319
    %vm326 = vmor %vm324, %vm325
    %v327 = vsel %vm326, %v319, %v323
    %v328 = vand.u32 2147483647, %v315
    %vm329 = vcmp.eq.f32.partialorder %v328, 8.507059e+37
    %v330 = vand.u32 %v315, 2147483648
    %v331 = vor.u32 1.1754944e-38, %v330
    %v332 = vsel %vm329, %v331, %v327
    %v333 = vmul.f32 %v310, %v332
    %v334 = vrcp.pop %v318
    %v335 = vmul.f32 %v318, %v334
    %v336 = vsub.f32 1.0, %v335
    %v337 = vmul.f32 %v334, %v336
    %v338 = vadd.f32 %v334, %v337
    %vm339 = vweird.f32 %v318
    %vm340 = vweird.f32 %v334
    %vm341 = vmor %vm339, %vm340
    %v342 = vsel %vm341, %v334, %v338
    %v343 = vand.u32 2147483647, %v318
    %vm344 = vcmp.eq.f32.partialorder %v343, 8.507059e+37
    %v345 = vand.u32 %v318, 2147483648
    %v346 = vor.u32 1.1754944e-38, %v345
    %v347 = vsel %vm344, %v346, %v342
    %v348 = vmul.f32 %v312, %v347
    %v350 = vsel %vm299, %v333, 0
    %v353 = vsel %vm299, %v348, 0
    %vm355 = vcmask 1043456
    %v356 = vsel %vm355, %v199, 0
    %358 = vmatpush.msra.mxu0 0.0
    %359 = vmatpush.msra.mxu0 0.0
    %360 = vmatpush.msra.mxu0 0.0
    %361 = vmatpush.msra.mxu0 0.0
    %362 = vmatpush.msra.mxu0 0.0
    %363 = vmatpush.msra.mxu0 0.0
    %364 = vmatpush.msra.mxu0 0.0
    %365 = vmatpush.msra.mxu0 0.0
    %366 = vmatpush.msra.mxu0 0.0
    %367 = vmatpush.msra.mxu0 0.0
    %368 = vmatpush.msra.mxu0 0.0
    %369 = vmatpush.msra.mxu0 0.0
    %370 = vmatpush.msra.mxu0 0.0
    %371 = vmatpush.msra.mxu0 0.0
    %372 = vmatpush.msra.mxu0 %v356
    %373 = vmatpush.msra.mxu0 %v202
    %374 = vmatmul.f32.gmra.mxu0 %v350
    %v375 = vpop.f32.mrf.mxu0
    %v376 = vadd.f32 0.0, %v375
    %377 = vmatmul.f32.gmra.mxu0 %v353
    %v378 = vpop.f32.mrf.mxu0
    %v379 = vadd.f32 0.0, %v378
    %380 = vdwg.mxu0
    %v381 = vld [vmem:[#allocation2 + $0x2a0] sm:$0xff]
    %v382 = vld [vmem:[#allocation2 + $0x2a8] sm:$0xff]
    %v383 = vld [vmem:[#allocation2 + $0x2b0] sm:$0xff]
    %v384 = vld [vmem:[#allocation2 + $0x2b8] sm:$0xff]
    %v385 = vld [vmem:[#allocation2 + $0x2c0] sm:$0xff]
    %v386 = vld [vmem:[#allocation2 + $0x2c8] sm:$0xff]
    %v387 = vld [vmem:[#allocation2 + $0x2d0] sm:$0xff]
    %v388 = vld [vmem:[#allocation2 + $0x2d8] sm:$0xff]
    %v389 = vld [vmem:[#allocation2 + $0x2e0] sm:$0xff]
    %v390 = vld [vmem:[#allocation2 + $0x2e8] sm:$0xff]
    %v391 = vld [vmem:[#allocation2 + $0x2f0] sm:$0xff]
    %v392 = vld [vmem:[#allocation2 + $0x2f8] sm:$0xff]
    %v393 = vld [vmem:[#allocation2 + $0x300] sm:$0xff]
    %v394 = vld [vmem:[#allocation2 + $0x308] sm:$0xff]
    %v395 = vld [vmem:[#allocation2 + $0x310] sm:$0xff]
    %v396 = vld [vmem:[#allocation2 + $0x318] sm:$0xff]
    %397 = vmatpush.msra.mxu0 %v396
    %398 = vmatpush.msra.mxu0 %v395
    %399 = vmatpush.msra.mxu0 %v394
    %400 = vmatpush.msra.mxu0 %v393
    %401 = vmatpush.msra.mxu0 %v392
    %402 = vmatpush.msra.mxu0 %v391
    %403 = vmatpush.msra.mxu0 %v390
    %404 = vmatpush.msra.mxu0 %v389
    %405 = vmatpush.msra.mxu0 %v388
    %406 = vmatpush.msra.mxu0 %v387
    %407 = vmatpush.msra.mxu0 %v386
    %408 = vmatpush.msra.mxu0 %v385
    %409 = vmatpush.msra.mxu0 %v384
    %410 = vmatpush.msra.mxu0 %v383
    %411 = vmatpush.msra.mxu0 %v382
    %412 = vmatpush.msra.mxu0 %v381
    %413 = vmatmul.f32.gmra.mxu0 %v376
    %v414 = vpop.f32.mrf.mxu0
    %v415 = vadd.f32 0.0, %v414
    %416 = vmatmul.f32.gmra.mxu0 %v379
    %v417 = vpop.f32.mrf.mxu0
    %v418 = vadd.f32 0.0, %v417
    %419 = vdwg.mxu0
    %v420 = vmax.f32 %v415, 0.0
    %v421 = vmax.f32 %v418, 0.0
    %v422 = vadd.f32 %v420, %v202
    %v423 = vadd.f32 %v421, %v199
    %v425 = vsel %vm355, %v423, 0
    %427 = vmatpush.msra.mxu0 0.0
    %428 = vmatpush.msra.mxu0 0.0
    %429 = vmatpush.msra.mxu0 0.0
    %430 = vmatpush.msra.mxu0 0.0
    %431 = vmatpush.msra.mxu0 0.0
    %432 = vmatpush.msra.mxu0 0.0
    %433 = vmatpush.msra.mxu0 0.0
    %434 = vmatpush.msra.mxu0 0.0
    %435 = vmatpush.msra.mxu0 0.0
    %436 = vmatpush.msra.mxu0 0.0
    %437 = vmatpush.msra.mxu0 0.0
    %438 = vmatpush.msra.mxu0 0.0
    %439 = vmatpush.msra.mxu0 0.0
    %440 = vmatpush.msra.mxu0 0.0
    %441 = vmatpush.msra.mxu0 %v425
    %442 = vmatpush.msra.mxu0 %v422
    %443 = vmatmul.f32.gmra.mxu0 %v350
    %v444 = vpop.f32.mrf.mxu0
    %v445 = vadd.f32 0.0, %v444
    %446 = vmatmul.f32.gmra.mxu0 %v353
    %v447 = vpop.f32.mrf.mxu0
    %v448 = vadd.f32 0.0, %v447
    %449 = vdwg.mxu0
    %v450 = vld [vmem:[#allocation2 + $0x320] sm:$0xff]
    %v451 = vld [vmem:[#allocation2 + $0x328] sm:$0xff]
    %v452 = vld [vmem:[#allocation2 + $0x330] sm:$0xff]
    %v453 = vld [vmem:[#allocation2 + $0x338] sm:$0xff]
    %v454 = vld [vmem:[#allocation2 + $0x340] sm:$0xff]
    %v455 = vld [vmem:[#allocation2 + $0x348] sm:$0xff]
    %v456 = vld [vmem:[#allocation2 + $0x350] sm:$0xff]
    %v457 = vld [vmem:[#allocation2 + $0x358] sm:$0xff]
    %v458 = vld [vmem:[#allocation2 + $0x360] sm:$0xff]
    %v459 = vld [vmem:[#allocation2 + $0x368] sm:$0xff]
    %v460 = vld [vmem:[#allocation2 + $0x370] sm:$0xff]
    %v461 = vld [vmem:[#allocation2 + $0x378] sm:$0xff]
    %v462 = vld [vmem:[#allocation2 + $0x380] sm:$0xff]
    %v463 = vld [vmem:[#allocation2 + $0x388] sm:$0xff]
    %v464 = vld [vmem:[#allocation2 + $0x390] sm:$0xff]
    %v465 = vld [vmem:[#allocation2 + $0x398] sm:$0xff]
    %466 = vmatpush.msra.mxu0 %v465
    %467 = vmatpush.msra.mxu0 %v464
    %468 = vmatpush.msra.mxu0 %v463
    %469 = vmatpush.msra.mxu0 %v462
    %470 = vmatpush.msra.mxu0 %v461
    %471 = vmatpush.msra.mxu0 %v460
    %472 = vmatpush.msra.mxu0 %v459
    %473 = vmatpush.msra.mxu0 %v458
    %474 = vmatpush.msra.mxu0 %v457
    %475 = vmatpush.msra.mxu0 %v456
    %476 = vmatpush.msra.mxu0 %v455
    %477 = vmatpush.msra.mxu0 %v454
    %478 = vmatpush.msra.mxu0 %v453
    %479 = vmatpush.msra.mxu0 %v452
    %480 = vmatpush.msra.mxu0 %v451
    %481 = vmatpush.msra.mxu0 %v450
    %482 = vmatmul.f32.gmra.mxu0 %v445
    %v483 = vpop.f32.mrf.mxu0
    %v484 = vadd.f32 0.0, %v483
    %485 = vmatmul.f32.gmra.mxu0 %v448
    %v486 = vpop.f32.mrf.mxu0
    %487 = vdwg.mxu0
    %v488 = vmax.f32 %v484, 0.0
    %v489 = vadd.f32 %v488, %v422
    %v490 = vld [vmem:[#allocation2 + $0x3a0] sm:$0xff]
    %v491 = vld [vmem:[#allocation2 + $0x3a8] sm:$0xff]
    %v492 = vld [vmem:[#allocation2 + $0x3b0] sm:$0xff]
    %v493 = vld [vmem:[#allocation2 + $0x3b8] sm:$0xff]
    %v494 = vld [vmem:[#allocation2 + $0x3c0] sm:$0xff]
    %v495 = vld [vmem:[#allocation2 + $0x3c8] sm:$0xff]
    %v496 = vld [vmem:[#allocation2 + $0x3d0] sm:$0xff]
    %v497 = vld [vmem:[#allocation2 + $0x3d8] sm:$0xff]
    %v498 = vld [vmem:[#allocation2 + $0x3e0] sm:$0xff]
    %v499 = vld [vmem:[#allocation2 + $0x3e8] sm:$0xff]
    %v500 = vld [vmem:[#allocation2 + $0x3f0] sm:$0xff]
    %v501 = vld [vmem:[#allocation2 + $0x3f8] sm:$0xff]
    %v502 = vld [vmem:[#allocation2 + $0x400] sm:$0xff]
    %v503 = vld [vmem:[#allocation2 + $0x408] sm:$0xff]
    %v504 = vld [vmem:[#allocation2 + $0x410] sm:$0xff]
    %v505 = vld [vmem:[#allocation2 + $0x418] sm:$0xff]
    %v506 = vld [vmem:[#allocation2 + $0x420] sm:$0x1]
    %v507 = vperm.slane %v506, 0
    %508 = vmatpush.msra.mxu0 %v505
    %509 = vmatpush.msra.mxu0 %v504
    %510 = vmatpush.msra.mxu0 %v503
    %511 = vmatpush.msra.mxu0 %v502
    %512 = vmatpush.msra.mxu0 %v501
    %513 = vmatpush.msra.mxu0 %v500
    %514 = vmatpush.msra.mxu0 %v499
    %515 = vmatpush.msra.mxu0 %v498
    %516 = vmatpush.msra.mxu0 %v497
    %517 = vmatpush.msra.mxu0 %v496
    %518 = vmatpush.msra.mxu0 %v495
    %519 = vmatpush.msra.mxu0 %v494
    %520 = vmatpush.msra.mxu0 %v493
    %521 = vmatpush.msra.mxu0 %v492
    %522 = vmatpush.msra.mxu0 %v491
    %523 = vmatpush.msra.mxu0 %v490
    %524 = vmatmul.f32.gmra.mxu0 %v489
    %v525 = vpop.f32.mrf.mxu0
    %v526 = vadd.f32 %v507, %v525
    %527 = vdwg.mxu0
    %v528 = vmax.f32 %v526, 0.0
    %v529 = vld [vmem:[#allocation2 + $0x428] sm:$0xff]
    %v530 = vld [vmem:[#allocation2 + $0x430] sm:$0xff]
    %v531 = vld [vmem:[#allocation2 + $0x438] sm:$0xff]
    %v532 = vld [vmem:[#allocation2 + $0x440] sm:$0xff]
    %v533 = vld [vmem:[#allocation2 + $0x448] sm:$0xff]
    %v534 = vld [vmem:[#allocation2 + $0x450] sm:$0xff]
    %v535 = vld [vmem:[#allocation2 + $0x458] sm:$0xff]
    %v536 = vld [vmem:[#allocation2 + $0x460] sm:$0xff]
    %v537 = vld [vmem:[#allocation2 + $0x468] sm:$0xff]
    %v538 = vld [vmem:[#allocation2 + $0x470] sm:$0xff]
    %v539 = vld [vmem:[#allocation2 + $0x478] sm:$0xff]
    %v540 = vld [vmem:[#allocation2 + $0x480] sm:$0xff]
    %v541 = vld [vmem:[#allocation2 + $0x488] sm:$0xff]
    %v542 = vld [vmem:[#allocation2 + $0x490] sm:$0xff]
    %v543 = vld [vmem:[#allocation2 + $0x498] sm:$0xff]
    %v544 = vld [vmem:[#allocation2 + $0x4a0] sm:$0xff]
    %v545 = vld [vmem:[#allocation2 + $0x4a8] sm:$0x1]
    %v546 = vperm.slane %v545, 0
    %547 = vmatpush.msra.mxu0 %v544
    %548 = vmatpush.msra.mxu0 %v543
    %549 = vmatpush.msra.mxu0 %v542
    %550 = vmatpush.msra.mxu0 %v541
    %551 = vmatpush.msra.mxu0 %v540
    %552 = vmatpush.msra.mxu0 %v539
    %553 = vmatpush.msra.mxu0 %v538
    %554 = vmatpush.msra.mxu0 %v537
    %555 = vmatpush.msra.mxu0 %v536
    %556 = vmatpush.msra.mxu0 %v535
    %557 = vmatpush.msra.mxu0 %v534
    %558 = vmatpush.msra.mxu0 %v533
    %559 = vmatpush.msra.mxu0 %v532
    %560 = vmatpush.msra.mxu0 %v531
    %561 = vmatpush.msra.mxu0 %v530
    %562 = vmatpush.msra.mxu0 %v529
    %563 = vmatmul.f32.gmra.mxu0 %v528
    %v564 = vpop.f32.mrf.mxu0
    %v565 = vadd.f32 %v546, %v564
    %566 = vdwg.mxu0
    %v567 = vmax.f32 %v565, 0.0
    %v568 = vld [vmem:[#allocation2 + $0x4b0] sm:$0xff]
    %v569 = vld [vmem:[#allocation2 + $0x4b8] sm:$0xff]
    %v570 = vld [vmem:[#allocation2 + $0x4c0] sm:$0xff]
    %v571 = vld [vmem:[#allocation2 + $0x4c8] sm:$0xff]
    %v572 = vld [vmem:[#allocation2 + $0x4d0] sm:$0xff]
    %v573 = vld [vmem:[#allocation2 + $0x4d8] sm:$0xff]
    %v574 = vld [vmem:[#allocation2 + $0x4e0] sm:$0xff]
    %v575 = vld [vmem:[#allocation2 + $0x4e8] sm:$0xff]
    %v576 = vld [vmem:[#allocation2 + $0x4f0] sm:$0xff]
    %v577 = vld [vmem:[#allocation2 + $0x4f8] sm:$0xff]
    %v578 = vld [vmem:[#allocation2 + $0x500] sm:$0xff]
    %v579 = vld [vmem:[#allocation2 + $0x508] sm:$0xff]
    %v580 = vld [vmem:[#allocation2 + $0x510] sm:$0xff]
    %v581 = vld [vmem:[#allocation2 + $0x518] sm:$0xff]
    %v582 = vld [vmem:[#allocation2 + $0x520] sm:$0xff]
    %v583 = vld [vmem:[#allocation2 + $0x528] sm:$0xff]
    %v584 = vld [vmem:[#allocation2 + $0x530] sm:$0x1]
    %v585 = vperm.slane %v584, 0
    %586 = vmatpush.msra.mxu0 %v583
    %587 = vmatpush.msra.mxu0 %v582
    %588 = vmatpush.msra.mxu0 %v581
    %589 = vmatpush.msra.mxu0 %v580
    %590 = vmatpush.msra.mxu0 %v579
    %591 = vmatpush.msra.mxu0 %v578
    %592 = vmatpush.msra.mxu0 %v577
    %593 = vmatpush.msra.mxu0 %v576
    %594 = vmatpush.msra.mxu0 %v575
    %595 = vmatpush.msra.mxu0 %v574
    %596 = vmatpush.msra.mxu0 %v573
    %597 = vmatpush.msra.mxu0 %v572
    %598 = vmatpush.msra.mxu0 %v571
    %599 = vmatpush.msra.mxu0 %v570
    %600 = vmatpush.msra.mxu0 %v569
    %601 = vmatpush.msra.mxu0 %v568
    %602 = vmatmul.f32.gmra.mxu0 %v567
    %v603 = vpop.f32.mrf.mxu0
    %v604 = vadd.f32 %v585, %v603
    %605 = vdwg.mxu0
    %v606 = vmax.f32 %v604, 0.0
    %v607 = vld [vmem:[#allocation2 + $0x538] sm:$0x1]
    %v608 = vld [vmem:[#allocation2 + $0x540] sm:$0x1]
    %v609 = vperm.slane %v607, 0
    %v610 = vmul.f32 %v606, %v609
    %v611 = vsel %vm196, %v610, 0.0
    %612 = vadd.xlane.f32.xlu0 %v611
    %v613 = vpop.xlane.xlu0 %612
    %v614 = vperm.slane %v608, 0
    %v615 = vadd.f32 %v613, %v614
    %vm616 = vcmask 1024
    %617 = vst.msk [vmem:[%s2] sm:$0x3] %vm616, %v615
    // Predicated region
    $region14: #{value_estimator.1} parent=1 // pred_check
      _
    $region15: #{value_estimator.1} parent=1 // pred_check_branch
      %619 = sbr.rel (0) target = $region17
    $region16: #{value_estimator.1} parent=1 // pred_region
      _
    $region17: #{value_estimator.1} parent=1 // pred_fallthru
      _
    // Predicated region
    $region18: #{value_estimator.1} parent=1 // pred_check
      _
    $region19: #{value_estimator.1} parent=1 // pred_check_branch
      %621 = sbr.rel (0) target = $region21
    $region20: #{value_estimator.1} parent=1 // pred_region
      _
    $region21: #{value_estimator.1} parent=1 // pred_fallthru
      _
    %622 = vsyncpa [#allocation3], 1

</llo_original>
